<compile_context>
chip_gen: v7x
topology: tpu7x:2x2x1
jax: 0.10.0
libtpu: 0.0.40
codegen_flags: <defaults>
</compile_context>

<pallas_src>
import math

import jax
import jax.numpy as jnp
from jax.experimental import pallas as pl
from jax.experimental.pallas import tpu as pltpu

_BLOCK_BYTES = 8 << 20        # target bytes for one x block (input tile == output tile)
_MAX_BLOCK_BYTES = 10 << 20   # hard cap before bailing out to a plain XLA clip
_VMEM_LIMIT_BYTES = 48 << 20  # 2x in + 2x out ~8-10 MiB buffers + bounds, < v7x 64 MiB
_MIN_PALLAS_BYTES = 1 << 20   # below this, pallas_call launch overhead dominates


def _chrelu_kernel(x_ref, b_ref, o_ref):
    # Elementwise clamp to [0, boundary]; b_ref ((TM, 1) or (1, TN)) broadcasts.
    o_ref[...] = jnp.minimum(jnp.maximum(x_ref[...], 0), b_ref[...])


def _round_up(a, b):
    return (a + b - 1) // b * b


def _col_tile(K, itemsize, sub):
    """Lane (last-dim) tile: as wide as possible while a minimum-height block
    still fits the block budget."""
    max_lanes = max(128, _BLOCK_BYTES // (sub * itemsize))
    if K % 128 == 0:
        if K <= max_lanes:
            return K
        # Largest 128-multiple divisor of K that fits the budget.
        t = (max_lanes // 128) * 128
        while t > 128:
            if K % t == 0:
                return t
            t -= 128
        return 128
    # Misaligned K: the only legal lane-dense choice is the full row.
    return K


def _row_tile(M, TN, itemsize, sub):
    """Sublane (second-to-last dim) tile, a multiple of `sub` (f32: 8)."""
    budget = max(sub, (_BLOCK_BYTES // (TN * itemsize)) // sub * sub)
    if M <= budget:
        return M       # full-dim block is always legal
    return budget      # ragged edge handled by the cdiv grid (masked writeback)


def _clamp2d(x2, b2, bound_axis):
    """Clamp x2 (M, K) to [0, b2], broadcasting b2.

    bound_axis == "row": b2 is (M, 1)  (per-row bound, 4D lane-dense path)
    bound_axis == "col": b2 is (1, K)  (per-column bound)
    """
    M, K = x2.shape
    itemsize = jnp.dtype(x2.dtype).itemsize
    sub = max(8, 32 // itemsize)     # 8 for f32, 16 for bf16, 32 for int8

    TN = _col_tile(K, itemsize, sub)
    if TN * sub * itemsize > _MAX_BLOCK_BYTES:
        # Extremely wide, misaligned rows that cannot be tiled lane-densely
        # without blowing VMEM: rare degenerate shape, let XLA handle it.
        return jnp.minimum(jnp.maximum(x2, 0), b2)

    TM = _row_tile(M, TN, itemsize, sub)
    grid = (pl.cdiv(M, TM), pl.cdiv(K, TN))

    # v7x has 2 TensorCores: make sure a 'parallel' axis has >= 2 blocks when
    # the whole array would otherwise land in a single grid step.
    if grid == (1, 1) and M >= 2 * sub:
        TM = _round_up(pl.cdiv(M, 2), sub)
        grid = (pl.cdiv(M, TM), 1)

    if bound_axis == "row":
        # Same block index across the (fastest) column axis -> VMEM-resident
        # for the whole row sweep; re-DMA'd only when the row block changes.
        b_spec = pl.BlockSpec((TM, 1), lambda i, j: (i, 0))
    else:
        b_spec = pl.BlockSpec((1, TN), lambda i, j: (0, j))

    return pl.pallas_call(
        _chrelu_kernel,
        out_shape=jax.ShapeDtypeStruct((M, K), x2.dtype),
        grid=grid,
        in_specs=[pl.BlockSpec((TM, TN), lambda i, j: (i, j)), b_spec],
        out_specs=pl.BlockSpec((TM, TN), lambda i, j: (i, j)),
        # Clamp is in-place friendly; callers should donate x under jit so the
        # alias does not force a defensive copy.
        input_output_aliases={0: 0},
        compiler_params=pltpu.CompilerParams(
            dimension_semantics=("parallel", "parallel"),
            vmem_limit_bytes=_VMEM_LIMIT_BYTES,
        ),
    )(x2, b2)


def _fold_rows(M, K):
    """Row-fold factor k (dividing M) so that k*K is a multiple of 128 and
    reasonably wide (>= 512 lanes when free). Returns 1 when not worthwhile."""
    if K % 128 == 0 or K >= 1024 or M <= 1:
        return 1
    base = 128 // math.gcd(K, 128)   # smallest k with (k * K) % 128 == 0
    k = base
    while k <= min(M, 8192):
        if M % k == 0:
            while k * 2 <= M and M % (k * 2) == 0 and k * K < 512:
                k *= 2
            return k
        k += base
    return 1


def _clamp2d_col(x2, b2):
    """Per-column-bound clamp; folds rows into lanes when K is narrow so the
    output stays lane-dense (unmasked full-width vector stores)."""
    M, K = x2.shape
    k = _fold_rows(M, K)
    if k > 1:
        out = _clamp2d(x2.reshape(M // k, k * K), jnp.tile(b2, (1, k)), "col")
        return out.reshape(M, K)
    return _clamp2d(x2, b2, "col")


def chrelu_4d(x, boundary):
    """x: [N, C, H, W], boundary: [C]."""
    N, C, H, W = x.shape
    HW = H * W
    b = boundary.astype(x.dtype)
    if HW % 128 == 0:
        # Lane-dense spatial dims: one bound per row of (N*C, H*W).
        x2 = x.reshape(N * C, HW)
        b2 = jnp.tile(b, N).reshape(N * C, 1)     # row r=(n,c) -> boundary[c]
        return _clamp2d(x2, b2, "row").reshape(N, C, H, W)
    # Small / misaligned spatial dims (7x7, 14x14, 28x28, ...): fold channels
    # into the lane axis so stores are wide; the repeated bound row is only
    # C*H*W elements -> negligible extra traffic.
    x2 = x.reshape(N, C * HW)
    b2 = jnp.repeat(b, HW).reshape(1, C * HW)
    return _clamp2d_col(x2, b2).reshape(N, C, H, W)


def chrelu_2d(x, boundary):
    """x: [N, C], boundary: [C]."""
    b2 = boundary.astype(x.dtype).reshape(1, x.shape[1])
    return _clamp2d_col(x, b2)


def chrelu(x, boundary):
    """Per-channel clamped ReLU: clamp(x, 0, boundary[c]) along the channel dim.

    Matches the PyTorch chRelu forward for 2D/4D inputs; other ranks pass
    through unchanged (the reference module does not touch them). For true
    in-place behaviour wrap calls in jax.jit(chrelu, donate_argnums=0).
    """
    boundary = jnp.asarray(boundary)
    if x.ndim not in (2, 4):
        return x
    nbytes = x.size * jnp.dtype(x.dtype).itemsize
    if nbytes < _MIN_PALLAS_BYTES:
        # Tiny tensors: a fused XLA clip beats kernel launch + pipeline overhead.
        shape = (1, -1, 1, 1) if x.ndim == 4 else (1, -1)
        return jnp.minimum(jnp.maximum(x, 0), boundary.astype(x.dtype).reshape(shape))
    if x.ndim == 4:
        return chrelu_4d(x, boundary)
    return chrelu_2d(x, boundary)


if __name__ == "__main__":
    key = jax.random.PRNGKey(0)
    ks = jax.random.split(key, 5)

    def ref_clamp(x, b):
        shape = (1, -1, 1, 1) if x.ndim == 4 else (1, -1)
        return jnp.minimum(jnp.maximum(x, 0), b.astype(x.dtype).reshape(shape))

    # 1) Small 4D case (2, 4, 16, 16): exercises the fused-XLA fast path.
    b4 = jnp.array([0.5, 1.0, 1.5, 2.0], dtype=jnp.float32)
    x_small4 = jax.random.normal(ks[0], (2, 4, 16, 16), jnp.float32) * 3.0
    out = jax.block_until_ready(chrelu(x_small4, b4))
    assert out.shape == x_small4.shape and out.dtype == x_small4.dtype
    assert jnp.allclose(out, ref_clamp(x_small4, b4)), "small 4D mismatch"

    # 2) Small 2D case (8, 4).
    x_small2 = jax.random.normal(ks[1], (8, 4), jnp.float32) * 3.0
    out = jax.block_until_ready(chrelu(x_small2, b4))
    assert jnp.allclose(out, ref_clamp(x_small2, b4)), "small 2D mismatch"

    # 3) 4D with lane-dense spatial dims (Pallas per-row-bound path).
    C = 8
    b8 = jnp.linspace(0.25, 2.0, C).astype(jnp.float32)
    x4 = jax.random.normal(ks[2], (4, C, 128, 128), jnp.float32) * 3.0
    out = jax.block_until_ready(chrelu(x4, b8))
    assert out.shape == x4.shape and out.dtype == x4.dtype
    assert jnp.allclose(out, ref_clamp(x4, b8)), "aligned 4D mismatch"

    # 4) 4D with misaligned 28x28 spatial dims (Pallas channel-fold path).
    C = 48
    b48 = jnp.linspace(0.1, 3.0, C).astype(jnp.float32)
    x4b = jax.random.normal(ks[3], (8, C, 28, 28), jnp.float32) * 3.0
    out = jax.block_until_ready(chrelu(x4b, b48))
    assert jnp.allclose(out, ref_clamp(x4b, b48)), "misaligned 4D mismatch"

    # 5) 2D with misaligned C (Pallas row-fold path).
    C = 96
    b96 = jnp.linspace(0.1, 3.0, C).astype(jnp.float32)
    x2 = jax.random.normal(ks[4], (4096, C), jnp.float32) * 3.0
    out = jax.block_until_ready(chrelu(x2, b96))
    assert jnp.allclose(out, ref_clamp(x2, b96)), "2D fold mismatch"

    print("KERNEL_OK")
</pallas_src>

<mosaic_0001>
module attributes {stable_mosaic.version = 11 : i64} {
  func.func @_chrelu_kernel(%arg0: i32, %arg1: i32, %arg2: memref<16x16384xf32, #tpu.memory_space<vmem>>, %arg3: memref<16x1xf32, #tpu.memory_space<vmem>>, %arg4: memref<16x16384xf32, #tpu.memory_space<vmem>>) attributes {dimension_semantics = [#tpu.dimension_semantics<parallel>, #tpu.dimension_semantics<parallel>], iteration_bounds = array<i64: 2, 1>, scalar_prefetch = 0 : i64, scratch_operands = 0 : i64, tpu.core_type = #tpu.core_type<tc>, window_params = [{transform_indices = @transform_0, window_bounds = array<i64: 16, 16384>}, {transform_indices = @transform_1, window_bounds = array<i64: 16, 1>}, {transform_indices = @transform_2, window_bounds = array<i64: 16, 16384>}]} {
    %c0 = arith.constant 0 : index
    %c0_0 = arith.constant 0 : index
    %0 = vector.load %arg2[%c0, %c0_0] : memref<16x16384xf32, #tpu.memory_space<vmem>>, vector<16x16384xf32>
    %cst = arith.constant 0.000000e+00 : f32
    %1 = vector.broadcast %cst : f32 to vector<16x16384xf32>
    %2 = arith.maximumf %0, %1 : vector<16x16384xf32>
    %c0_1 = arith.constant 0 : index
    %c0_2 = arith.constant 0 : index
    %3 = vector.load %arg3[%c0_1, %c0_2] : memref<16x1xf32, #tpu.memory_space<vmem>>, vector<16x1xf32>
    %4 = vector.broadcast %3 : vector<16x1xf32> to vector<16x16384xf32>
    %5 = arith.minimumf %2, %4 : vector<16x16384xf32>
    %c0_3 = arith.constant 0 : index
    %c0_4 = arith.constant 0 : index
    %6 = vector.load %arg4[%c0_3, %c0_4] : memref<16x16384xf32, #tpu.memory_space<vmem>>, vector<16x16384xf32>
    tpu.vector_store %arg4[%c0_3, %c0_4], %5 {strides = array<i32>} : memref<16x16384xf32, #tpu.memory_space<vmem>>, vector<16x16384xf32>,
    return
  }
  func.func @transform_0(%arg0: i32, %arg1: i32) -> (i32, i32) {
    %c0_i32 = arith.constant 0 : i32
    return %arg0, %arg1 : i32, i32
  }
  func.func @transform_1(%arg0: i32, %arg1: i32) -> (i32, i32) {
    %c0_i32 = arith.constant 0 : i32
    %c0_i32_0 = arith.constant 0 : i32
    return %arg0, %c0_i32 : i32, i32
  }
  func.func @transform_2(%arg0: i32, %arg1: i32) -> (i32, i32) {
    %c0_i32 = arith.constant 0 : i32
    return %arg0, %arg1 : i32, i32
  }
}

</mosaic_0001>

<llo_original>
// kernel: tpu_custom_call.1
$region0: #{tpu_custom_call.1}
  #allocation0 [shape = 'u32[]', space=smem, size = 0x4, offset = 0x4, fixed_abs, tag = 'smem constant byte address 0x4 - core index']
  #allocation1 [shape = 'u32[144,128]{1,0:T(1,128)}', space=vmem, size = 0x12000, scoped, tag = 'internal scratch']
  %s0 = inlined_call_operand.hbm [shape: f32[32,16384], index: 0, kind: input, shape index: {}, may-alias: {0,2}]
  %s1 = inlined_call_operand.vmem [shape: f32[32,1], index: 1, kind: input, shape index: {}]
  %s2 = inlined_call_operand.hbm [shape: f32[32,16384], index: 2, kind: output, shape index: {}, may-alias: {0,2}]
  %s3 = sld [smem:[#allocation0]]
  $region45: #{tpu_custom_call.1} parent=0
    _
  %s5 = ssub.s32 1, %s3
  %s6 = scalar_select 0, %s5, %s3
  $region1: #{tpu_custom_call.1} parent=0
    #allocation2 [shape = 'u8[2097152]{0}', space=vmem, size = 0x200000, scoped, tag = 'input window, operand 0']
    #allocation3 [shape = 's32[2]{0}', space=sflag, size = 0x8, scoped, tag = 'scoped memory for tpu_custom_call.1']
    #allocation4 [shape = 's32[2]{0}', space=sflag, size = 0x8, scoped, tag = 'scoped memory for tpu_custom_call.1']
    #allocation5 [shape = 'u8[2097152]{0}', space=vmem, size = 0x200000, scoped, tag = 'output window, operand 0']
    %7 = vsyncpa [#allocation3], 0
    %s8 = scalar_lea.sflag [#allocation3], 1
    %9 = vsyncpa %s8, 0
    %10 = vsyncpa [#allocation4], 0
    %s11 = scalar_lea.sflag [#allocation4], 1
    %12 = vsyncpa %s11, 0
    loop: start=0, step=1, limit=4
    $region2: #{tpu_custom_call.1} parent=1 // loop_pre_header
      _
    $region3: #{tpu_custom_call.1} parent=1 // loop_header
      %s14 = sphi 0, %s18
      %p15 = scmp.ge.s32.totalorder %s14, 4
      %s21 = sphi 0, %s33
      %s22 = sphi 0, %s29
      %s23 = sphi 0, %s21
      %s24 = sphi 0, %s22
      %s25 = sphi 0, %s23
      %s26 = sphi 0, %s24
      %s38 = sphi 0, %s40
      %s41 = sphi 0, %s38
      %s42 = sphi 0, %s41
      %s58 = sphi 0, %s42
      %s64 = sphi 0, %s66
      %s67 = sphi 0, %s64
      %s68 = sphi 0, %s67
      %s84 = sphi 0, %s68
      %s92 = sphi 0, %s94
      %s95 = sphi 0, %s92
      %s96 = sphi 0, %s95
      %s112 = sphi 0, %s96
    $region4: #{tpu_custom_call.1} parent=1 // loop_header_branch
      %17 = sbr.rel (%p15) target = $region8
    $region5: #{tpu_custom_call.1} parent=1 // loop_body
      %s19 = ssub.s32 %s14, 1
      %s20 = ssub.s32 %s14, 2
      %s27 = sadd.s32 1, %s22
      %p28 = scmp.ge.s32.totalorder %s27, 1
      %s29 = scalar_select %p28, 0, %s27
      %s30 = sadd.s32 1, %s21
      %s31 = scalar_select %p28, %s30, %s21
      %p32 = scmp.ge.s32.totalorder %s31, 2
      %s33 = scalar_select %p32, 0, %s31
      %s34 = ssub.s32 %s21, %s33
      %s35 = ssub.s32 %s22, %s29
      %s36 = sor.u32 %s34, %s35
      %p37 = scmp.eq.s32.totalorder %s36, 0
      %s39 = sadd.s32 %s38, 1
      %s40 = scalar_select %p37, %s38, %s39
      %p43 = pneg %p37
      %p44 = scmp.eq.s32.totalorder %s14, 1
      %p45 = por %p43, %p44
      %p46 = scmp.ne.s32.totalorder %s38, %s41
      %p47 = scmp.eq.s32.totalorder %s14, 0
      %p48 = por %p46, %p47
      %p49 = scmp.ne.s32.totalorder %s38, %s41
      %p50 = scmp.eq.s32.totalorder %s19, 1
      %p51 = por %p49, %p50
      %p52 = scmp.ne.s32.totalorder %s41, %s42
      %p53 = scmp.eq.s32.totalorder %s19, 0
      %p54 = por %p52, %p53
      %p55 = scmp.ne.s32.totalorder %s41, %s42
      %p56 = scmp.eq.s32.totalorder %s20, 1
      %p57 = por %p55, %p56
      %p59 = scmp.ne.s32.totalorder %s42, %s58
      %p60 = scmp.eq.s32.totalorder %s20, 0
      %p61 = por %p59, %p60
      %s62 = ssub.s32 %s21, %s33
      %p63 = scmp.eq.s32.totalorder %s62, 0
      %s65 = sadd.s32 %s64, 1
      %s66 = scalar_select %p63, %s64, %s65
      %p69 = pneg %p63
      %p70 = scmp.eq.s32.totalorder %s14, 1
      %p71 = por %p69, %p70
      %p72 = scmp.ne.s32.totalorder %s64, %s67
      %p73 = scmp.eq.s32.totalorder %s14, 0
      %p74 = por %p72, %p73
      %p75 = scmp.ne.s32.totalorder %s64, %s67
      %p76 = scmp.eq.s32.totalorder %s19, 1
      %p77 = por %p75, %p76
      %p78 = scmp.ne.s32.totalorder %s67, %s68
      %p79 = scmp.eq.s32.totalorder %s19, 0
      %p80 = por %p78, %p79
      %p81 = scmp.ne.s32.totalorder %s67, %s68
      %p82 = scmp.eq.s32.totalorder %s20, 1
      %p83 = por %p81, %p82
      %p85 = scmp.ne.s32.totalorder %s68, %s84
      %p86 = scmp.eq.s32.totalorder %s20, 0
      %p87 = por %p85, %p86
      %s88 = ssub.s32 %s21, %s33
      %s89 = ssub.s32 %s22, %s29
      %s90 = sor.u32 %s88, %s89
      %p91 = scmp.eq.s32.totalorder %s90, 0
      %s93 = sadd.s32 %s92, 1
      %s94 = scalar_select %p91, %s92, %s93
      %p97 = pneg %p91
      %p98 = scmp.eq.s32.totalorder %s14, 1
      %p99 = por %p97, %p98
      %p100 = scmp.ne.s32.totalorder %s92, %s95
      %p101 = scmp.eq.s32.totalorder %s14, 0
      %p102 = por %p100, %p101
      %p103 = scmp.ne.s32.totalorder %s92, %s95
      %p104 = scmp.eq.s32.totalorder %s19, 1
      %p105 = por %p103, %p104
      %p106 = scmp.ne.s32.totalorder %s95, %s96
      %p107 = scmp.eq.s32.totalorder %s19, 0
      %p108 = por %p106, %p107
      %p109 = scmp.ne.s32.totalorder %s95, %s96
      %p110 = scmp.eq.s32.totalorder %s20, 1
      %p111 = por %p109, %p110
      %p113 = scmp.ne.s32.totalorder %s96, %s112
      %p114 = scmp.eq.s32.totalorder %s20, 0
      %p115 = por %p113, %p114
      %p116 = scmp.le.s32.totalorder 1, %s14
      %p117 = scmp.lt.s32.totalorder %s14, 3
      %p118 = pnand %p116, %p117
      %p119 = pneg %p118
      // Predicated region
      $region9: #{tpu_custom_call.1} parent=5 // pred_check
        _
      $region10: #{tpu_custom_call.1} parent=5 // pred_check_branch
        %121 = sbr.rel (%p118) target = $region12
      $region11: #{tpu_custom_call.1} parent=5 // pred_region
        %s122 = ssub.s32 %s14, 1
      $region12: #{tpu_custom_call.1} parent=5 // pred_fallthru
        _
      %p123 = scmp.lt.s32.totalorder %s14, 2
      // Predicated region
      $region13: #{tpu_custom_call.1} parent=5 // pred_check
        %p124 = pneg %p123
      $region14: #{tpu_custom_call.1} parent=5 // pred_check_branch
        %126 = sbr.rel (%p124) target = $region16
      $region15: #{tpu_custom_call.1} parent=5 // pred_region
        // Predicated region
        $region17: #{tpu_custom_call.1} parent=15 // pred_check
          %p127 = pneg %p48
        $region18: #{tpu_custom_call.1} parent=15 // pred_check_branch
          %129 = sbr.rel (%p127) target = $region20
        $region19: #{tpu_custom_call.1} parent=15 // pred_region
          %s130 = sand.u32 %s38, 1
          %s131 = scalar_lea.sflag [#allocation3], %s130
          %s132 = sand.u32 %s38, 1
          %s133 = smul.addr %s132, 2048
          %s134 = scalar_lea.vmem [#allocation2], %s133
          %s135 = smul.u32 2, %s21
          %s136 = smul.u32 128, %s22
          %s138 = ssub.s32 32768, 32768
          %139 = vsyncadd %s131, %s138
          %s140 = smul.addr %s135, 128
          %s141 = sadd.s32 %s136, %s140
          %s142 = smul.addr %s141, 128
          %s143 = scalar_lea.hbm %s0, %s142
          %s144 = sshll.u32 %s134, 4
          %s145 = int_to_ptr.vmem [resolvable:$true] %s144
          %150 = dma.hbm_to_vmem [thread:$0]  %s143, 32768, %s145, %s131, 16384, 16384, 1024
        $region20: #{tpu_custom_call.1} parent=15 // pred_fallthru
          _
        // Predicated region
        $region21: #{tpu_custom_call.1} parent=15 // pred_check
          %p151 = pneg %p74
        $region22: #{tpu_custom_call.1} parent=15 // pred_check_branch
          %153 = sbr.rel (%p151) target = $region24
        $region23: #{tpu_custom_call.1} parent=15 // pred_region
          %s154 = smul.u32 2, %s21
          %p155 = scmp.lt.s32.totalorder %s154, 3
          %s156 = scalar_select %p155, %s154, 3
          %s157 = smul.addr %s156, 8
          %s158 = scalar_lea.vmem %s1, %s157
          %s159 = smul.u32 2, %s21
        $region24: #{tpu_custom_call.1} parent=15 // pred_fallthru
          _
      $region16: #{tpu_custom_call.1} parent=5 // pred_fallthru
        _
      %p160 = scmp.le.s32.totalorder 1, %s14
      %p161 = scmp.lt.s32.totalorder %s14, 3
      %p162 = pnand %p160, %p161
      %p163 = pneg %p162
      // Predicated region
      $region25: #{tpu_custom_call.1} parent=5 // pred_check
        _
      $region26: #{tpu_custom_call.1} parent=5 // pred_check_branch
        %165 = sbr.rel (%p162) target = $region28
      $region27: #{tpu_custom_call.1} parent=5 // pred_region
        %s166 = ssub.s32 %s14, 1
        %s167 = sand.u32 %s41, 1
        %s168 = scalar_lea.sflag [#allocation3], %s167
        %s169 = sand.u32 %s41, 1
        %s170 = smul.addr %s169, 2048
        %s171 = scalar_lea.vmem [#allocation2], %s170
        // Predicated region
        $region29: #{tpu_custom_call.1} parent=27 // pred_check
          %p172 = pneg %p54
        $region30: #{tpu_custom_call.1} parent=27 // pred_check_branch
          %174 = sbr.rel (%p172) target = $region32
        $region31: #{tpu_custom_call.1} parent=27 // pred_region
          %175 = dma.done %s168, 32768
        $region32: #{tpu_custom_call.1} parent=27 // pred_fallthru
          _
        %s176 = sand.u32 %s41, 1
        %s177 = scalar_lea.sflag [#allocation3], %s176
        %s178 = sand.u32 %s41, 1
        %s179 = smul.addr %s178, 2048
        %s180 = scalar_lea.vmem [#allocation2], %s179
        %p181 = pneg %p54
        %p182 = pneg %p51
        %s183 = smul.u32 2, %s23
        %p184 = scmp.lt.s32.totalorder %s183, 3
        %s185 = scalar_select %p184, %s183, 3
        %s186 = smul.addr %s185, 8
        %s187 = scalar_lea.vmem %s1, %s186
        %p188 = pneg %p80
        %p189 = pneg %p77
        %p190 = pneg %p108
        %p191 = pneg %p105
        %s192 = sand.u32 %s95, 1
        %s193 = scalar_lea.sflag [#allocation4], %s192
        %s194 = sand.u32 %s95, 1
        %s195 = smul.addr %s194, 2048
        %s196 = scalar_lea.vmem [#allocation5], %s195
        %s197 = smul.u32 2, %s23
        %s198 = smul.u32 128, %s24
        %s199 = smul.u32 2, %s23
        %p200 = scmp.lt.s32.totalorder %s199, 3
        %s201 = scalar_select %p200, %s199, 3
        %s202 = smul.addr %s201, 8
        %s203 = scalar_lea.vmem %s1, %s202
        %s204 = smul.u32 2, %s23
        %s205 = smul.u32 2, %s23
        %s206 = smul.u32 128, %s24
        %v207 = vld [vmem:[%s171] sm:$0xff]
        %v208 = vld [vmem:[%s171 + $0x8] sm:$0xff]
        %v209 = vld [vmem:[%s171 + $0x10] sm:$0xff]
        %v210 = vld [vmem:[%s171 + $0x18] sm:$0xff]
        %v211 = vld [vmem:[%s171 + $0x20] sm:$0xff]
        %v212 = vld [vmem:[%s171 + $0x28] sm:$0xff]
        %v213 = vld [vmem:[%s171 + $0x30] sm:$0xff]
        %v214 = vld [vmem:[%s171 + $0x38] sm:$0xff]
        %v215 = vld [vmem:[%s171 + $0x40] sm:$0xff]
        %v216 = vld [vmem:[%s171 + $0x48] sm:$0xff]
        %v217 = vld [vmem:[%s171 + $0x50] sm:$0xff]
        %v218 = vld [vmem:[%s171 + $0x58] sm:$0xff]
        %v219 = vld [vmem:[%s171 + $0x60] sm:$0xff]
        %v220 = vld [vmem:[%s171 + $0x68] sm:$0xff]
        %v221 = vld [vmem:[%s171 + $0x70] sm:$0xff]
        %v222 = vld [vmem:[%s171 + $0x78] sm:$0xff]
        %v223 = vld [vmem:[%s171 + $0x80] sm:$0xff]
        %v224 = vld [vmem:[%s171 + $0x88] sm:$0xff]
        %v225 = vld [vmem:[%s171 + $0x90] sm:$0xff]
        %v226 = vld [vmem:[%s171 + $0x98] sm:$0xff]
        %v227 = vld [vmem:[%s171 + $0xa0] sm:$0xff]
        %v228 = vld [vmem:[%s171 + $0xa8] sm:$0xff]
        %v229 = vld [vmem:[%s171 + $0xb0] sm:$0xff]
        %v230 = vld [vmem:[%s171 + $0xb8] sm:$0xff]
        %v231 = vld [vmem:[%s171 + $0xc0] sm:$0xff]
        %v232 = vld [vmem:[%s171 + $0xc8] sm:$0xff]
        %v233 = vld [vmem:[%s171 + $0xd0] sm:$0xff]
        %v234 = vld [vmem:[%s171 + $0xd8] sm:$0xff]
        %v235 = vld [vmem:[%s171 + $0xe0] sm:$0xff]
        %v236 = vld [vmem:[%s171 + $0xe8] sm:$0xff]
        %v237 = vld [vmem:[%s171 + $0xf0] sm:$0xff]
        %v238 = vld [vmem:[%s171 + $0xf8] sm:$0xff]
        %v239 = vld [vmem:[%s171 + $0x100] sm:$0xff]
        %v240 = vld [vmem:[%s171 + $0x108] sm:$0xff]
        %v241 = vld [vmem:[%s171 + $0x110] sm:$0xff]
        %v242 = vld [vmem:[%s171 + $0x118] sm:$0xff]
        %v243 = vld [vmem:[%s171 + $0x120] sm:$0xff]
        %v244 = vld [vmem:[%s171 + $0x128] sm:$0xff]
        %v245 = vld [vmem:[%s171 + $0x130] sm:$0xff]
        %v246 = vld [vmem:[%s171 + $0x138] sm:$0xff]
        %v247 = vld [vmem:[%s171 + $0x140] sm:$0xff]
        %v248 = vld [vmem:[%s171 + $0x148] sm:$0xff]
        %v249 = vld [vmem:[%s171 + $0x150] sm:$0xff]
        %v250 = vld [vmem:[%s171 + $0x158] sm:$0xff]
        %v251 = vld [vmem:[%s171 + $0x160] sm:$0xff]
        %v252 = vld [vmem:[%s171 + $0x168] sm:$0xff]
        %v253 = vld [vmem:[%s171 + $0x170] sm:$0xff]
        %v254 = vld [vmem:[%s171 + $0x178] sm:$0xff]
        %v255 = vld [vmem:[%s171 + $0x180] sm:$0xff]
        %v256 = vld [vmem:[%s171 + $0x188] sm:$0xff]
        %v257 = vld [vmem:[%s171 + $0x190] sm:$0xff]
        %v258 = vld [vmem:[%s171 + $0x198] sm:$0xff]
        %v259 = vld [vmem:[%s171 + $0x1a0] sm:$0xff]
        %v260 = vld [vmem:[%s171 + $0x1a8] sm:$0xff]
        %v261 = vld [vmem:[%s171 + $0x1b0] sm:$0xff]
        %v262 = vld [vmem:[%s171 + $0x1b8] sm:$0xff]
        %v263 = vld [vmem:[%s171 + $0x1c0] sm:$0xff]
        %v264 = vld [vmem:[%s171 + $0x1c8] sm:$0xff]
        %v265 = vld [vmem:[%s171 + $0x1d0] sm:$0xff]
        %v266 = vld [vmem:[%s171 + $0x1d8] sm:$0xff]
        %v267 = vld [vmem:[%s171 + $0x1e0] sm:$0xff]
        %v268 = vld [vmem:[%s171 + $0x1e8] sm:$0xff]
        %v269 = vld [vmem:[%s171 + $0x1f0] sm:$0xff]
        %v270 = vld [vmem:[%s171 + $0x1f8] sm:$0xff]
        %v271 = vld [vmem:[%s171 + $0x200] sm:$0xff]
        %v272 = vld [vmem:[%s171 + $0x208] sm:$0xff]
        %v273 = vld [vmem:[%s171 + $0x210] sm:$0xff]
        %v274 = vld [vmem:[%s171 + $0x218] sm:$0xff]
        %v275 = vld [vmem:[%s171 + $0x220] sm:$0xff]
        %v276 = vld [vmem:[%s171 + $0x228] sm:$0xff]
        %v277 = vld [vmem:[%s171 + $0x230] sm:$0xff]
        %v278 = vld [vmem:[%s171 + $0x238] sm:$0xff]
        %v279 = vld [vmem:[%s171 + $0x240] sm:$0xff]
        %v280 = vld [vmem:[%s171 + $0x248] sm:$0xff]
        %v281 = vld [vmem:[%s171 + $0x250] sm:$0xff]
        %v282 = vld [vmem:[%s171 + $0x258] sm:$0xff]
        %v283 = vld [vmem:[%s171 + $0x260] sm:$0xff]
        %v284 = vld [vmem:[%s171 + $0x268] sm:$0xff]
        %v285 = vld [vmem:[%s171 + $0x270] sm:$0xff]
        %v286 = vld [vmem:[%s171 + $0x278] sm:$0xff]
        %v287 = vld [vmem:[%s171 + $0x280] sm:$0xff]
        %v288 = vld [vmem:[%s171 + $0x288] sm:$0xff]
        %v289 = vld [vmem:[%s171 + $0x290] sm:$0xff]
        %v290 = vld [vmem:[%s171 + $0x298] sm:$0xff]
        %v291 = vld [vmem:[%s171 + $0x2a0] sm:$0xff]
        %v292 = vld [vmem:[%s171 + $0x2a8] sm:$0xff]
        %v293 = vld [vmem:[%s171 + $0x2b0] sm:$0xff]
        %v294 = vld [vmem:[%s171 + $0x2b8] sm:$0xff]
        %v295 = vld [vmem:[%s171 + $0x2c0] sm:$0xff]
        %v296 = vld [vmem:[%s171 + $0x2c8] sm:$0xff]
        %v297 = vld [vmem:[%s171 + $0x2d0] sm:$0xff]
        %v298 = vld [vmem:[%s171 + $0x2d8] sm:$0xff]
        %v299 = vld [vmem:[%s171 + $0x2e0] sm:$0xff]
        %v300 = vld [vmem:[%s171 + $0x2e8] sm:$0xff]
        %v301 = vld [vmem:[%s171 + $0x2f0] sm:$0xff]
        %v302 = vld [vmem:[%s171 + $0x2f8] sm:$0xff]
        %v303 = vld [vmem:[%s171 + $0x300] sm:$0xff]
        %v304 = vld [vmem:[%s171 + $0x308] sm:$0xff]
        %v305 = vld [vmem:[%s171 + $0x310] sm:$0xff]
        %v306 = vld [vmem:[%s171 + $0x318] sm:$0xff]
        %v307 = vld [vmem:[%s171 + $0x320] sm:$0xff]
        %v308 = vld [vmem:[%s171 + $0x328] sm:$0xff]
        %v309 = vld [vmem:[%s171 + $0x330] sm:$0xff]
        %v310 = vld [vmem:[%s171 + $0x338] sm:$0xff]
        %v311 = vld [vmem:[%s171 + $0x340] sm:$0xff]
        %v312 = vld [vmem:[%s171 + $0x348] sm:$0xff]
        %v313 = vld [vmem:[%s171 + $0x350] sm:$0xff]
        %v314 = vld [vmem:[%s171 + $0x358] sm:$0xff]
        %v315 = vld [vmem:[%s171 + $0x360] sm:$0xff]
        %v316 = vld [vmem:[%s171 + $0x368] sm:$0xff]
        %v317 = vld [vmem:[%s171 + $0x370] sm:$0xff]
        %v318 = vld [vmem:[%s171 + $0x378] sm:$0xff]
        %v319 = vld [vmem:[%s171 + $0x380] sm:$0xff]
        %v320 = vld [vmem:[%s171 + $0x388] sm:$0xff]
        %v321 = vld [vmem:[%s171 + $0x390] sm:$0xff]
        %v322 = vld [vmem:[%s171 + $0x398] sm:$0xff]
        %v323 = vld [vmem:[%s171 + $0x3a0] sm:$0xff]
        %v324 = vld [vmem:[%s171 + $0x3a8] sm:$0xff]
        %v325 = vld [vmem:[%s171 + $0x3b0] sm:$0xff]
        %v326 = vld [vmem:[%s171 + $0x3b8] sm:$0xff]
        %v327 = vld [vmem:[%s171 + $0x3c0] sm:$0xff]
        %v328 = vld [vmem:[%s171 + $0x3c8] sm:$0xff]
        %v329 = vld [vmem:[%s171 + $0x3d0] sm:$0xff]
        %v330 = vld [vmem:[%s171 + $0x3d8] sm:$0xff]
        %v331 = vld [vmem:[%s171 + $0x3e0] sm:$0xff]
        %v332 = vld [vmem:[%s171 + $0x3e8] sm:$0xff]
        %v333 = vld [vmem:[%s171 + $0x3f0] sm:$0xff]
        %v334 = vld [vmem:[%s171 + $0x3f8] sm:$0xff]
        %v335 = vld [vmem:[%s171 + $0x400] sm:$0xff]
        %v336 = vld [vmem:[%s171 + $0x408] sm:$0xff]
        %v337 = vld [vmem:[%s171 + $0x410] sm:$0xff]
        %v338 = vld [vmem:[%s171 + $0x418] sm:$0xff]
        %v339 = vld [vmem:[%s171 + $0x420] sm:$0xff]
        %v340 = vld [vmem:[%s171 + $0x428] sm:$0xff]
        %v341 = vld [vmem:[%s171 + $0x430] sm:$0xff]
        %v342 = vld [vmem:[%s171 + $0x438] sm:$0xff]
        %v343 = vld [vmem:[%s171 + $0x440] sm:$0xff]
        %v344 = vld [vmem:[%s171 + $0x448] sm:$0xff]
        %v345 = vld [vmem:[%s171 + $0x450] sm:$0xff]
        %v346 = vld [vmem:[%s171 + $0x458] sm:$0xff]
        %v347 = vld [vmem:[%s171 + $0x460] sm:$0xff]
        %v348 = vld [vmem:[%s171 + $0x468] sm:$0xff]
        %v349 = vld [vmem:[%s171 + $0x470] sm:$0xff]
        %v350 = vld [vmem:[%s171 + $0x478] sm:$0xff]
        %v351 = vld [vmem:[%s171 + $0x480] sm:$0xff]
        %v352 = vld [vmem:[%s171 + $0x488] sm:$0xff]
        %v353 = vld [vmem:[%s171 + $0x490] sm:$0xff]
        %v354 = vld [vmem:[%s171 + $0x498] sm:$0xff]
        %v355 = vld [vmem:[%s171 + $0x4a0] sm:$0xff]
        %v356 = vld [vmem:[%s171 + $0x4a8] sm:$0xff]
        %v357 = vld [vmem:[%s171 + $0x4b0] sm:$0xff]
        %v358 = vld [vmem:[%s171 + $0x4b8] sm:$0xff]
        %v359 = vld [vmem:[%s171 + $0x4c0] sm:$0xff]
        %v360 = vld [vmem:[%s171 + $0x4c8] sm:$0xff]
        %v361 = vld [vmem:[%s171 + $0x4d0] sm:$0xff]
        %v362 = vld [vmem:[%s171 + $0x4d8] sm:$0xff]
        %v363 = vld [vmem:[%s171 + $0x4e0] sm:$0xff]
        %v364 = vld [vmem:[%s171 + $0x4e8] sm:$0xff]
        %v365 = vld [vmem:[%s171 + $0x4f0] sm:$0xff]
        %v366 = vld [vmem:[%s171 + $0x4f8] sm:$0xff]
        %v367 = vld [vmem:[%s171 + $0x500] sm:$0xff]
        %v368 = vld [vmem:[%s171 + $0x508] sm:$0xff]
        %v369 = vld [vmem:[%s171 + $0x510] sm:$0xff]
        %v370 = vld [vmem:[%s171 + $0x518] sm:$0xff]
        %v371 = vld [vmem:[%s171 + $0x520] sm:$0xff]
        %v372 = vld [vmem:[%s171 + $0x528] sm:$0xff]
        %v373 = vld [vmem:[%s171 + $0x530] sm:$0xff]
        %v374 = vld [vmem:[%s171 + $0x538] sm:$0xff]
        %v375 = vld [vmem:[%s171 + $0x540] sm:$0xff]
        %v376 = vld [vmem:[%s171 + $0x548] sm:$0xff]
        %v377 = vld [vmem:[%s171 + $0x550] sm:$0xff]
        %v378 = vld [vmem:[%s171 + $0x558] sm:$0xff]
        %v379 = vld [vmem:[%s171 + $0x560] sm:$0xff]
        %v380 = vld [vmem:[%s171 + $0x568] sm:$0xff]
        %v381 = vld [vmem:[%s171 + $0x570] sm:$0xff]
        %v382 = vld [vmem:[%s171 + $0x578] sm:$0xff]
        %v383 = vld [vmem:[%s171 + $0x580] sm:$0xff]
        %v384 = vld [vmem:[%s171 + $0x588] sm:$0xff]
        %v385 = vld [vmem:[%s171 + $0x590] sm:$0xff]
        %v386 = vld [vmem:[%s171 + $0x598] sm:$0xff]
        %v387 = vld [vmem:[%s171 + $0x5a0] sm:$0xff]
        %v388 = vld [vmem:[%s171 + $0x5a8] sm:$0xff]
        %v389 = vld [vmem:[%s171 + $0x5b0] sm:$0xff]
        %v390 = vld [vmem:[%s171 + $0x5b8] sm:$0xff]
        %v391 = vld [vmem:[%s171 + $0x5c0] sm:$0xff]
        %v392 = vld [vmem:[%s171 + $0x5c8] sm:$0xff]
        %v393 = vld [vmem:[%s171 + $0x5d0] sm:$0xff]
        %v394 = vld [vmem:[%s171 + $0x5d8] sm:$0xff]
        %v395 = vld [vmem:[%s171 + $0x5e0] sm:$0xff]
        %v396 = vld [vmem:[%s171 + $0x5e8] sm:$0xff]
        %v397 = vld [vmem:[%s171 + $0x5f0] sm:$0xff]
        %v398 = vld [vmem:[%s171 + $0x5f8] sm:$0xff]
        %v399 = vld [vmem:[%s171 + $0x600] sm:$0xff]
        %v400 = vld [vmem:[%s171 + $0x608] sm:$0xff]
        %v401 = vld [vmem:[%s171 + $0x610] sm:$0xff]
        %v402 = vld [vmem:[%s171 + $0x618] sm:$0xff]
        %v403 = vld [vmem:[%s171 + $0x620] sm:$0xff]
        %v404 = vld [vmem:[%s171 + $0x628] sm:$0xff]
        %v405 = vld [vmem:[%s171 + $0x630] sm:$0xff]
        %v406 = vld [vmem:[%s171 + $0x638] sm:$0xff]
        %v407 = vld [vmem:[%s171 + $0x640] sm:$0xff]
        %v408 = vld [vmem:[%s171 + $0x648] sm:$0xff]
        %v409 = vld [vmem:[%s171 + $0x650] sm:$0xff]
        %v410 = vld [vmem:[%s171 + $0x658] sm:$0xff]
        %v411 = vld [vmem:[%s171 + $0x660] sm:$0xff]
        %v412 = vld [vmem:[%s171 + $0x668] sm:$0xff]
        %v413 = vld [vmem:[%s171 + $0x670] sm:$0xff]
        %v414 = vld [vmem:[%s171 + $0x678] sm:$0xff]
        %v415 = vld [vmem:[%s171 + $0x680] sm:$0xff]
        %v416 = vld [vmem:[%s171 + $0x688] sm:$0xff]
        %v417 = vld [vmem:[%s171 + $0x690] sm:$0xff]
        %v418 = vld [vmem:[%s171 + $0x698] sm:$0xff]
        %v419 = vld [vmem:[%s171 + $0x6a0] sm:$0xff]
        %v420 = vld [vmem:[%s171 + $0x6a8] sm:$0xff]
        %v421 = vld [vmem:[%s171 + $0x6b0] sm:$0xff]
        %v422 = vld [vmem:[%s171 + $0x6b8] sm:$0xff]
        %v423 = vld [vmem:[%s171 + $0x6c0] sm:$0xff]
        %v424 = vld [vmem:[%s171 + $0x6c8] sm:$0xff]
        %v425 = vld [vmem:[%s171 + $0x6d0] sm:$0xff]
        %v426 = vld [vmem:[%s171 + $0x6d8] sm:$0xff]
        %v427 = vld [vmem:[%s171 + $0x6e0] sm:$0xff]
        %v428 = vld [vmem:[%s171 + $0x6e8] sm:$0xff]
        %v429 = vld [vmem:[%s171 + $0x6f0] sm:$0xff]
        %v430 = vld [vmem:[%s171 + $0x6f8] sm:$0xff]
        %v431 = vld [vmem:[%s171 + $0x700] sm:$0xff]
        %v432 = vld [vmem:[%s171 + $0x708] sm:$0xff]
        %v433 = vld [vmem:[%s171 + $0x710] sm:$0xff]
        %v434 = vld [vmem:[%s171 + $0x718] sm:$0xff]
        %v435 = vld [vmem:[%s171 + $0x720] sm:$0xff]
        %v436 = vld [vmem:[%s171 + $0x728] sm:$0xff]
        %v437 = vld [vmem:[%s171 + $0x730] sm:$0xff]
        %v438 = vld [vmem:[%s171 + $0x738] sm:$0xff]
        %v439 = vld [vmem:[%s171 + $0x740] sm:$0xff]
        %v440 = vld [vmem:[%s171 + $0x748] sm:$0xff]
        %v441 = vld [vmem:[%s171 + $0x750] sm:$0xff]
        %v442 = vld [vmem:[%s171 + $0x758] sm:$0xff]
        %v443 = vld [vmem:[%s171 + $0x760] sm:$0xff]
        %v444 = vld [vmem:[%s171 + $0x768] sm:$0xff]
        %v445 = vld [vmem:[%s171 + $0x770] sm:$0xff]
        %v446 = vld [vmem:[%s171 + $0x778] sm:$0xff]
        %v447 = vld [vmem:[%s171 + $0x780] sm:$0xff]
        %v448 = vld [vmem:[%s171 + $0x788] sm:$0xff]
        %v449 = vld [vmem:[%s171 + $0x790] sm:$0xff]
        %v450 = vld [vmem:[%s171 + $0x798] sm:$0xff]
        %v451 = vld [vmem:[%s171 + $0x7a0] sm:$0xff]
        %v452 = vld [vmem:[%s171 + $0x7a8] sm:$0xff]
        %v453 = vld [vmem:[%s171 + $0x7b0] sm:$0xff]
        %v454 = vld [vmem:[%s171 + $0x7b8] sm:$0xff]
        %v455 = vld [vmem:[%s171 + $0x7c0] sm:$0xff]
        %v456 = vld [vmem:[%s171 + $0x7c8] sm:$0xff]
        %v457 = vld [vmem:[%s171 + $0x7d0] sm:$0xff]
        %v458 = vld [vmem:[%s171 + $0x7d8] sm:$0xff]
        %v459 = vld [vmem:[%s171 + $0x7e0] sm:$0xff]
        %v460 = vld [vmem:[%s171 + $0x7e8] sm:$0xff]
        %v461 = vld [vmem:[%s171 + $0x7f0] sm:$0xff]
        %v462 = vld [vmem:[%s171 + $0x7f8] sm:$0xff]
        %v463 = vmax.f32 %v207, 0.0
        %v464 = vmax.f32 %v208, 0.0
        %v465 = vmax.f32 %v209, 0.0
        %v466 = vmax.f32 %v210, 0.0
        %v467 = vmax.f32 %v211, 0.0
        %v468 = vmax.f32 %v212, 0.0
        %v469 = vmax.f32 %v213, 0.0
        %v470 = vmax.f32 %v214, 0.0
        %v471 = vmax.f32 %v215, 0.0
        %v472 = vmax.f32 %v216, 0.0
        %v473 = vmax.f32 %v217, 0.0
        %v474 = vmax.f32 %v218, 0.0
        %v475 = vmax.f32 %v219, 0.0
        %v476 = vmax.f32 %v220, 0.0
        %v477 = vmax.f32 %v221, 0.0
        %v478 = vmax.f32 %v222, 0.0
        %v479 = vmax.f32 %v223, 0.0
        %v480 = vmax.f32 %v224, 0.0
        %v481 = vmax.f32 %v225, 0.0
        %v482 = vmax.f32 %v226, 0.0
        %v483 = vmax.f32 %v227, 0.0
        %v484 = vmax.f32 %v228, 0.0
        %v485 = vmax.f32 %v229, 0.0
        %v486 = vmax.f32 %v230, 0.0
        %v487 = vmax.f32 %v231, 0.0
        %v488 = vmax.f32 %v232, 0.0
        %v489 = vmax.f32 %v233, 0.0
        %v490 = vmax.f32 %v234, 0.0
        %v491 = vmax.f32 %v235, 0.0
        %v492 = vmax.f32 %v236, 0.0
        %v493 = vmax.f32 %v237, 0.0
        %v494 = vmax.f32 %v238, 0.0
        %v495 = vmax.f32 %v239, 0.0
        %v496 = vmax.f32 %v240, 0.0
        %v497 = vmax.f32 %v241, 0.0
        %v498 = vmax.f32 %v242, 0.0
        %v499 = vmax.f32 %v243, 0.0
        %v500 = vmax.f32 %v244, 0.0
        %v501 = vmax.f32 %v245, 0.0
        %v502 = vmax.f32 %v246, 0.0
        %v503 = vmax.f32 %v247, 0.0
        %v504 = vmax.f32 %v248, 0.0
        %v505 = vmax.f32 %v249, 0.0
        %v506 = vmax.f32 %v250, 0.0
        %v507 = vmax.f32 %v251, 0.0
        %v508 = vmax.f32 %v252, 0.0
        %v509 = vmax.f32 %v253, 0.0
        %v510 = vmax.f32 %v254, 0.0
        %v511 = vmax.f32 %v255, 0.0
        %v512 = vmax.f32 %v256, 0.0
        %v513 = vmax.f32 %v257, 0.0
        %v514 = vmax.f32 %v258, 0.0
        %v515 = vmax.f32 %v259, 0.0
        %v516 = vmax.f32 %v260, 0.0
        %v517 = vmax.f32 %v261, 0.0
        %v518 = vmax.f32 %v262, 0.0
        %v519 = vmax.f32 %v263, 0.0
        %v520 = vmax.f32 %v264, 0.0
        %v521 = vmax.f32 %v265, 0.0
        %v522 = vmax.f32 %v266, 0.0
        %v523 = vmax.f32 %v267, 0.0
        %v524 = vmax.f32 %v268, 0.0
        %v525 = vmax.f32 %v269, 0.0
        %v526 = vmax.f32 %v270, 0.0
        %v527 = vmax.f32 %v271, 0.0
        %v528 = vmax.f32 %v272, 0.0
        %v529 = vmax.f32 %v273, 0.0
        %v530 = vmax.f32 %v274, 0.0
        %v531 = vmax.f32 %v275, 0.0
        %v532 = vmax.f32 %v276, 0.0
        %v533 = vmax.f32 %v277, 0.0
        %v534 = vmax.f32 %v278, 0.0
        %v535 = vmax.f32 %v279, 0.0
        %v536 = vmax.f32 %v280, 0.0
        %v537 = vmax.f32 %v281, 0.0
        %v538 = vmax.f32 %v282, 0.0
        %v539 = vmax.f32 %v283, 0.0
        %v540 = vmax.f32 %v284, 0.0
        %v541 = vmax.f32 %v285, 0.0
        %v542 = vmax.f32 %v286, 0.0
        %v543 = vmax.f32 %v287, 0.0
        %v544 = vmax.f32 %v288, 0.0
        %v545 = vmax.f32 %v289, 0.0
        %v546 = vmax.f32 %v290, 0.0
        %v547 = vmax.f32 %v291, 0.0
        %v548 = vmax.f32 %v292, 0.0
        %v549 = vmax.f32 %v293, 0.0
        %v550 = vmax.f32 %v294, 0.0
        %v551 = vmax.f32 %v295, 0.0
        %v552 = vmax.f32 %v296, 0.0
        %v553 = vmax.f32 %v297, 0.0
        %v554 = vmax.f32 %v298, 0.0
        %v555 = vmax.f32 %v299, 0.0
        %v556 = vmax.f32 %v300, 0.0
        %v557 = vmax.f32 %v301, 0.0
        %v558 = vmax.f32 %v302, 0.0
        %v559 = vmax.f32 %v303, 0.0
        %v560 = vmax.f32 %v304, 0.0
        %v561 = vmax.f32 %v305, 0.0
        %v562 = vmax.f32 %v306, 0.0
        %v563 = vmax.f32 %v307, 0.0
        %v564 = vmax.f32 %v308, 0.0
        %v565 = vmax.f32 %v309, 0.0
        %v566 = vmax.f32 %v310, 0.0
        %v567 = vmax.f32 %v311, 0.0
        %v568 = vmax.f32 %v312, 0.0
        %v569 = vmax.f32 %v313, 0.0
        %v570 = vmax.f32 %v314, 0.0
        %v571 = vmax.f32 %v315, 0.0
        %v572 = vmax.f32 %v316, 0.0
        %v573 = vmax.f32 %v317, 0.0
        %v574 = vmax.f32 %v318, 0.0
        %v575 = vmax.f32 %v319, 0.0
        %v576 = vmax.f32 %v320, 0.0
        %v577 = vmax.f32 %v321, 0.0
        %v578 = vmax.f32 %v322, 0.0
        %v579 = vmax.f32 %v323, 0.0
        %v580 = vmax.f32 %v324, 0.0
        %v581 = vmax.f32 %v325, 0.0
        %v582 = vmax.f32 %v326, 0.0
        %v583 = vmax.f32 %v327, 0.0
        %v584 = vmax.f32 %v328, 0.0
        %v585 = vmax.f32 %v329, 0.0
        %v586 = vmax.f32 %v330, 0.0
        %v587 = vmax.f32 %v331, 0.0
        %v588 = vmax.f32 %v332, 0.0
        %v589 = vmax.f32 %v333, 0.0
        %v590 = vmax.f32 %v334, 0.0
        %v591 = vmax.f32 %v335, 0.0
        %v592 = vmax.f32 %v336, 0.0
        %v593 = vmax.f32 %v337, 0.0
        %v594 = vmax.f32 %v338, 0.0
        %v595 = vmax.f32 %v339, 0.0
        %v596 = vmax.f32 %v340, 0.0
        %v597 = vmax.f32 %v341, 0.0
        %v598 = vmax.f32 %v342, 0.0
        %v599 = vmax.f32 %v343, 0.0
        %v600 = vmax.f32 %v344, 0.0
        %v601 = vmax.f32 %v345, 0.0
        %v602 = vmax.f32 %v346, 0.0
        %v603 = vmax.f32 %v347, 0.0
        %v604 = vmax.f32 %v348, 0.0
        %v605 = vmax.f32 %v349, 0.0
        %v606 = vmax.f32 %v350, 0.0
        %v607 = vmax.f32 %v351, 0.0
        %v608 = vmax.f32 %v352, 0.0
        %v609 = vmax.f32 %v353, 0.0
        %v610 = vmax.f32 %v354, 0.0
        %v611 = vmax.f32 %v355, 0.0
        %v612 = vmax.f32 %v356, 0.0
        %v613 = vmax.f32 %v357, 0.0
        %v614 = vmax.f32 %v358, 0.0
        %v615 = vmax.f32 %v359, 0.0
        %v616 = vmax.f32 %v360, 0.0
        %v617 = vmax.f32 %v361, 0.0
        %v618 = vmax.f32 %v362, 0.0
        %v619 = vmax.f32 %v363, 0.0
        %v620 = vmax.f32 %v364, 0.0
        %v621 = vmax.f32 %v365, 0.0
        %v622 = vmax.f32 %v366, 0.0
        %v623 = vmax.f32 %v367, 0.0
        %v624 = vmax.f32 %v368, 0.0
        %v625 = vmax.f32 %v369, 0.0
        %v626 = vmax.f32 %v370, 0.0
        %v627 = vmax.f32 %v371, 0.0
        %v628 = vmax.f32 %v372, 0.0
        %v629 = vmax.f32 %v373, 0.0
        %v630 = vmax.f32 %v374, 0.0
        %v631 = vmax.f32 %v375, 0.0
        %v632 = vmax.f32 %v376, 0.0
        %v633 = vmax.f32 %v377, 0.0
        %v634 = vmax.f32 %v378, 0.0
        %v635 = vmax.f32 %v379, 0.0
        %v636 = vmax.f32 %v380, 0.0
        %v637 = vmax.f32 %v381, 0.0
        %v638 = vmax.f32 %v382, 0.0
        %v639 = vmax.f32 %v383, 0.0
        %v640 = vmax.f32 %v384, 0.0
        %v641 = vmax.f32 %v385, 0.0
        %v642 = vmax.f32 %v386, 0.0
        %v643 = vmax.f32 %v387, 0.0
        %v644 = vmax.f32 %v388, 0.0
        %v645 = vmax.f32 %v389, 0.0
        %v646 = vmax.f32 %v390, 0.0
        %v647 = vmax.f32 %v391, 0.0
        %v648 = vmax.f32 %v392, 0.0
        %v649 = vmax.f32 %v393, 0.0
        %v650 = vmax.f32 %v394, 0.0
        %v651 = vmax.f32 %v395, 0.0
        %v652 = vmax.f32 %v396, 0.0
        %v653 = vmax.f32 %v397, 0.0
        %v654 = vmax.f32 %v398, 0.0
        %v655 = vmax.f32 %v399, 0.0
        %v656 = vmax.f32 %v400, 0.0
        %v657 = vmax.f32 %v401, 0.0
        %v658 = vmax.f32 %v402, 0.0
        %v659 = vmax.f32 %v403, 0.0
        %v660 = vmax.f32 %v404, 0.0
        %v661 = vmax.f32 %v405, 0.0
        %v662 = vmax.f32 %v406, 0.0
        %v663 = vmax.f32 %v407, 0.0
        %v664 = vmax.f32 %v408, 0.0
        %v665 = vmax.f32 %v409, 0.0
        %v666 = vmax.f32 %v410, 0.0
        %v667 = vmax.f32 %v411, 0.0
        %v668 = vmax.f32 %v412, 0.0
        %v669 = vmax.f32 %v413, 0.0
        %v670 = vmax.f32 %v414, 0.0
        %v671 = vmax.f32 %v415, 0.0
        %v672 = vmax.f32 %v416, 0.0
        %v673 = vmax.f32 %v417, 0.0
        %v674 = vmax.f32 %v418, 0.0
        %v675 = vmax.f32 %v419, 0.0
        %v676 = vmax.f32 %v420, 0.0
        %v677 = vmax.f32 %v421, 0.0
        %v678 = vmax.f32 %v422, 0.0
        %v679 = vmax.f32 %v423, 0.0
        %v680 = vmax.f32 %v424, 0.0
        %v681 = vmax.f32 %v425, 0.0
        %v682 = vmax.f32 %v426, 0.0
        %v683 = vmax.f32 %v427, 0.0
        %v684 = vmax.f32 %v428, 0.0
        %v685 = vmax.f32 %v429, 0.0
        %v686 = vmax.f32 %v430, 0.0
        %v687 = vmax.f32 %v431, 0.0
        %v688 = vmax.f32 %v432, 0.0
        %v689 = vmax.f32 %v433, 0.0
        %v690 = vmax.f32 %v434, 0.0
        %v691 = vmax.f32 %v435, 0.0
        %v692 = vmax.f32 %v436, 0.0
        %v693 = vmax.f32 %v437, 0.0
        %v694 = vmax.f32 %v438, 0.0
        %v695 = vmax.f32 %v439, 0.0
        %v696 = vmax.f32 %v440, 0.0
        %v697 = vmax.f32 %v441, 0.0
        %v698 = vmax.f32 %v442, 0.0
        %v699 = vmax.f32 %v443, 0.0
        %v700 = vmax.f32 %v444, 0.0
        %v701 = vmax.f32 %v445, 0.0
        %v702 = vmax.f32 %v446, 0.0
        %v703 = vmax.f32 %v447, 0.0
        %v704 = vmax.f32 %v448, 0.0
        %v705 = vmax.f32 %v449, 0.0
        %v706 = vmax.f32 %v450, 0.0
        %v707 = vmax.f32 %v451, 0.0
        %v708 = vmax.f32 %v452, 0.0
        %v709 = vmax.f32 %v453, 0.0
        %v710 = vmax.f32 %v454, 0.0
        %v711 = vmax.f32 %v455, 0.0
        %v712 = vmax.f32 %v456, 0.0
        %v713 = vmax.f32 %v457, 0.0
        %v714 = vmax.f32 %v458, 0.0
        %v715 = vmax.f32 %v459, 0.0
        %v716 = vmax.f32 %v460, 0.0
        %v717 = vmax.f32 %v461, 0.0
        %v718 = vmax.f32 %v462, 0.0
        %v719 = vld [vmem:[%s203] sm:$0xff]
        %v720 = vld [vmem:[%s203 + $0x8] sm:$0xff]
        %722 = vset.pattern.permute.xlu0 0
        %723 = vperm.xlu0 %722, %v719
        %v724 = vpop.permute.xlu0 %723
        %727 = vset.pattern.permute.xlu0 0
        %728 = vperm.xlu0 %727, %v720
        %v729 = vpop.permute.xlu0 %728
        %v731 = vmin.f32 %v463, %v724
        %v732 = vmin.f32 %v464, %v724
        %v733 = vmin.f32 %v465, %v724
        %v734 = vmin.f32 %v466, %v724
        %v735 = vmin.f32 %v467, %v724
        %v736 = vmin.f32 %v468, %v724
        %v737 = vmin.f32 %v469, %v724
        %v738 = vmin.f32 %v470, %v724
        %v739 = vmin.f32 %v471, %v724
        %v740 = vmin.f32 %v472, %v724
        %v741 = vmin.f32 %v473, %v724
        %v742 = vmin.f32 %v474, %v724
        %v743 = vmin.f32 %v475, %v724
        %v744 = vmin.f32 %v476, %v724
        %v745 = vmin.f32 %v477, %v724
        %v746 = vmin.f32 %v478, %v724
        %v747 = vmin.f32 %v479, %v724
        %v748 = vmin.f32 %v480, %v724
        %v749 = vmin.f32 %v481, %v724
        %v750 = vmin.f32 %v482, %v724
        %v751 = vmin.f32 %v483, %v724
        %v752 = vmin.f32 %v484, %v724
        %v753 = vmin.f32 %v485, %v724
        %v754 = vmin.f32 %v486, %v724
        %v755 = vmin.f32 %v487, %v724
        %v756 = vmin.f32 %v488, %v724
        %v757 = vmin.f32 %v489, %v724
        %v758 = vmin.f32 %v490, %v724
        %v759 = vmin.f32 %v491, %v724
        %v760 = vmin.f32 %v492, %v724
        %v761 = vmin.f32 %v493, %v724
        %v762 = vmin.f32 %v494, %v724
        %v763 = vmin.f32 %v495, %v724
        %v764 = vmin.f32 %v496, %v724
        %v765 = vmin.f32 %v497, %v724
        %v766 = vmin.f32 %v498, %v724
        %v767 = vmin.f32 %v499, %v724
        %v768 = vmin.f32 %v500, %v724
        %v769 = vmin.f32 %v501, %v724
        %v770 = vmin.f32 %v502, %v724
        %v771 = vmin.f32 %v503, %v724
        %v772 = vmin.f32 %v504, %v724
        %v773 = vmin.f32 %v505, %v724
        %v774 = vmin.f32 %v506, %v724
        %v775 = vmin.f32 %v507, %v724
        %v776 = vmin.f32 %v508, %v724
        %v777 = vmin.f32 %v509, %v724
        %v778 = vmin.f32 %v510, %v724
        %v779 = vmin.f32 %v511, %v724
        %v780 = vmin.f32 %v512, %v724
        %v781 = vmin.f32 %v513, %v724
        %v782 = vmin.f32 %v514, %v724
        %v783 = vmin.f32 %v515, %v724
        %v784 = vmin.f32 %v516, %v724
        %v785 = vmin.f32 %v517, %v724
        %v786 = vmin.f32 %v518, %v724
        %v787 = vmin.f32 %v519, %v724
        %v788 = vmin.f32 %v520, %v724
        %v789 = vmin.f32 %v521, %v724
        %v790 = vmin.f32 %v522, %v724
        %v791 = vmin.f32 %v523, %v724
        %v792 = vmin.f32 %v524, %v724
        %v793 = vmin.f32 %v525, %v724
        %v794 = vmin.f32 %v526, %v724
        %v795 = vmin.f32 %v527, %v724
        %v796 = vmin.f32 %v528, %v724
        %v797 = vmin.f32 %v529, %v724
        %v798 = vmin.f32 %v530, %v724
        %v799 = vmin.f32 %v531, %v724
        %v800 = vmin.f32 %v532, %v724
        %v801 = vmin.f32 %v533, %v724
        %v802 = vmin.f32 %v534, %v724
        %v803 = vmin.f32 %v535, %v724
        %v804 = vmin.f32 %v536, %v724
        %v805 = vmin.f32 %v537, %v724
        %v806 = vmin.f32 %v538, %v724
        %v807 = vmin.f32 %v539, %v724
        %v808 = vmin.f32 %v540, %v724
        %v809 = vmin.f32 %v541, %v724
        %v810 = vmin.f32 %v542, %v724
        %v811 = vmin.f32 %v543, %v724
        %v812 = vmin.f32 %v544, %v724
        %v813 = vmin.f32 %v545, %v724
        %v814 = vmin.f32 %v546, %v724
        %v815 = vmin.f32 %v547, %v724
        %v816 = vmin.f32 %v548, %v724
        %v817 = vmin.f32 %v549, %v724
        %v818 = vmin.f32 %v550, %v724
        %v819 = vmin.f32 %v551, %v724
        %v820 = vmin.f32 %v552, %v724
        %v821 = vmin.f32 %v553, %v724
        %v822 = vmin.f32 %v554, %v724
        %v823 = vmin.f32 %v555, %v724
        %v824 = vmin.f32 %v556, %v724
        %v825 = vmin.f32 %v557, %v724
        %v826 = vmin.f32 %v558, %v724
        %v827 = vmin.f32 %v559, %v724
        %v828 = vmin.f32 %v560, %v724
        %v829 = vmin.f32 %v561, %v724
        %v830 = vmin.f32 %v562, %v724
        %v831 = vmin.f32 %v563, %v724
        %v832 = vmin.f32 %v564, %v724
        %v833 = vmin.f32 %v565, %v724
        %v834 = vmin.f32 %v566, %v724
        %v835 = vmin.f32 %v567, %v724
        %v836 = vmin.f32 %v568, %v724
        %v837 = vmin.f32 %v569, %v724
        %v838 = vmin.f32 %v570, %v724
        %v839 = vmin.f32 %v571, %v724
        %v840 = vmin.f32 %v572, %v724
        %v841 = vmin.f32 %v573, %v724
        %v842 = vmin.f32 %v574, %v724
        %v843 = vmin.f32 %v575, %v724
        %v844 = vmin.f32 %v576, %v724
        %v845 = vmin.f32 %v577, %v724
        %v846 = vmin.f32 %v578, %v724
        %v847 = vmin.f32 %v579, %v724
        %v848 = vmin.f32 %v580, %v724
        %v849 = vmin.f32 %v581, %v724
        %v850 = vmin.f32 %v582, %v724
        %v851 = vmin.f32 %v583, %v724
        %v852 = vmin.f32 %v584, %v724
        %v853 = vmin.f32 %v585, %v724
        %v854 = vmin.f32 %v586, %v724
        %v855 = vmin.f32 %v587, %v724
        %v856 = vmin.f32 %v588, %v724
        %v857 = vmin.f32 %v589, %v724
        %v858 = vmin.f32 %v590, %v724
        %v859 = vmin.f32 %v591, %v729
        %v860 = vmin.f32 %v592, %v729
        %v861 = vmin.f32 %v593, %v729
        %v862 = vmin.f32 %v594, %v729
        %v863 = vmin.f32 %v595, %v729
        %v864 = vmin.f32 %v596, %v729
        %v865 = vmin.f32 %v597, %v729
        %v866 = vmin.f32 %v598, %v729
        %v867 = vmin.f32 %v599, %v729
        %v868 = vmin.f32 %v600, %v729
        %v869 = vmin.f32 %v601, %v729
        %v870 = vmin.f32 %v602, %v729
        %v871 = vmin.f32 %v603, %v729
        %v872 = vmin.f32 %v604, %v729
        %v873 = vmin.f32 %v605, %v729
        %v874 = vmin.f32 %v606, %v729
        %v875 = vmin.f32 %v607, %v729
        %v876 = vmin.f32 %v608, %v729
        %v877 = vmin.f32 %v609, %v729
        %v878 = vmin.f32 %v610, %v729
        %v879 = vmin.f32 %v611, %v729
        %v880 = vmin.f32 %v612, %v729
        %v881 = vmin.f32 %v613, %v729
        %v882 = vmin.f32 %v614, %v729
        %v883 = vmin.f32 %v615, %v729
        %v884 = vmin.f32 %v616, %v729
        %v885 = vmin.f32 %v617, %v729
        %v886 = vmin.f32 %v618, %v729
        %v887 = vmin.f32 %v619, %v729
        %v888 = vmin.f32 %v620, %v729
        %v889 = vmin.f32 %v621, %v729
        %v890 = vmin.f32 %v622, %v729
        %v891 = vmin.f32 %v623, %v729
        %v892 = vmin.f32 %v624, %v729
        %v893 = vmin.f32 %v625, %v729
        %v894 = vmin.f32 %v626, %v729
        %v895 = vmin.f32 %v627, %v729
        %v896 = vmin.f32 %v628, %v729
        %v897 = vmin.f32 %v629, %v729
        %v898 = vmin.f32 %v630, %v729
        %v899 = vmin.f32 %v631, %v729
        %v900 = vmin.f32 %v632, %v729
        %v901 = vmin.f32 %v633, %v729
        %v902 = vmin.f32 %v634, %v729
        %v903 = vmin.f32 %v635, %v729
        %v904 = vmin.f32 %v636, %v729
        %v905 = vmin.f32 %v637, %v729
        %v906 = vmin.f32 %v638, %v729
        %v907 = vmin.f32 %v639, %v729
        %v908 = vmin.f32 %v640, %v729
        %v909 = vmin.f32 %v641, %v729
        %v910 = vmin.f32 %v642, %v729
        %v911 = vmin.f32 %v643, %v729
        %v912 = vmin.f32 %v644, %v729
        %v913 = vmin.f32 %v645, %v729
        %v914 = vmin.f32 %v646, %v729
        %v915 = vmin.f32 %v647, %v729
        %v916 = vmin.f32 %v648, %v729
        %v917 = vmin.f32 %v649, %v729
        %v918 = vmin.f32 %v650, %v729
        %v919 = vmin.f32 %v651, %v729
        %v920 = vmin.f32 %v652, %v729
        %v921 = vmin.f32 %v653, %v729
        %v922 = vmin.f32 %v654, %v729
        %v923 = vmin.f32 %v655, %v729
        %v924 = vmin.f32 %v656, %v729
        %v925 = vmin.f32 %v657, %v729
        %v926 = vmin.f32 %v658, %v729
        %v927 = vmin.f32 %v659, %v729
        %v928 = vmin.f32 %v660, %v729
        %v929 = vmin.f32 %v661, %v729
        %v930 = vmin.f32 %v662, %v729
        %v931 = vmin.f32 %v663, %v729
        %v932 = vmin.f32 %v664, %v729
        %v933 = vmin.f32 %v665, %v729
        %v934 = vmin.f32 %v666, %v729
        %v935 = vmin.f32 %v667, %v729
        %v936 = vmin.f32 %v668, %v729
        %v937 = vmin.f32 %v669, %v729
        %v938 = vmin.f32 %v670, %v729
        %v939 = vmin.f32 %v671, %v729
        %v940 = vmin.f32 %v672, %v729
        %v941 = vmin.f32 %v673, %v729
        %v942 = vmin.f32 %v674, %v729
        %v943 = vmin.f32 %v675, %v729
        %v944 = vmin.f32 %v676, %v729
        %v945 = vmin.f32 %v677, %v729
        %v946 = vmin.f32 %v678, %v729
        %v947 = vmin.f32 %v679, %v729
        %v948 = vmin.f32 %v680, %v729
        %v949 = vmin.f32 %v681, %v729
        %v950 = vmin.f32 %v682, %v729
        %v951 = vmin.f32 %v683, %v729
        %v952 = vmin.f32 %v684, %v729
        %v953 = vmin.f32 %v685, %v729
        %v954 = vmin.f32 %v686, %v729
        %v955 = vmin.f32 %v687, %v729
        %v956 = vmin.f32 %v688, %v729
        %v957 = vmin.f32 %v689, %v729
        %v958 = vmin.f32 %v690, %v729
        %v959 = vmin.f32 %v691, %v729
        %v960 = vmin.f32 %v692, %v729
        %v961 = vmin.f32 %v693, %v729
        %v962 = vmin.f32 %v694, %v729
        %v963 = vmin.f32 %v695, %v729
        %v964 = vmin.f32 %v696, %v729
        %v965 = vmin.f32 %v697, %v729
        %v966 = vmin.f32 %v698, %v729
        %v967 = vmin.f32 %v699, %v729
        %v968 = vmin.f32 %v700, %v729
        %v969 = vmin.f32 %v701, %v729
        %v970 = vmin.f32 %v702, %v729
        %v971 = vmin.f32 %v703, %v729
        %v972 = vmin.f32 %v704, %v729
        %v973 = vmin.f32 %v705, %v729
        %v974 = vmin.f32 %v706, %v729
        %v975 = vmin.f32 %v707, %v729
        %v976 = vmin.f32 %v708, %v729
        %v977 = vmin.f32 %v709, %v729
        %v978 = vmin.f32 %v710, %v729
        %v979 = vmin.f32 %v711, %v729
        %v980 = vmin.f32 %v712, %v729
        %v981 = vmin.f32 %v713, %v729
        %v982 = vmin.f32 %v714, %v729
        %v983 = vmin.f32 %v715, %v729
        %v984 = vmin.f32 %v716, %v729
        %v985 = vmin.f32 %v717, %v729
        %v986 = vmin.f32 %v718, %v729
        %987 = vst [vmem:[%s196] sm:$0xff] %v731
        %988 = vst [vmem:[%s196 + $0x8] sm:$0xff] %v732
        %989 = vst [vmem:[%s196 + $0x10] sm:$0xff] %v733
        %990 = vst [vmem:[%s196 + $0x18] sm:$0xff] %v734
        %991 = vst [vmem:[%s196 + $0x20] sm:$0xff] %v735
        %992 = vst [vmem:[%s196 + $0x28] sm:$0xff] %v736
        %993 = vst [vmem:[%s196 + $0x30] sm:$0xff] %v737
        %994 = vst [vmem:[%s196 + $0x38] sm:$0xff] %v738
        %995 = vst [vmem:[%s196 + $0x40] sm:$0xff] %v739
        %996 = vst [vmem:[%s196 + $0x48] sm:$0xff] %v740
        %997 = vst [vmem:[%s196 + $0x50] sm:$0xff] %v741
        %998 = vst [vmem:[%s196 + $0x58] sm:$0xff] %v742
        %999 = vst [vmem:[%s196 + $0x60] sm:$0xff] %v743
        %1000 = vst [vmem:[%s196 + $0x68] sm:$0xff] %v744
        %1001 = vst [vmem:[%s196 + $0x70] sm:$0xff] %v745
        %1002 = vst [vmem:[%s196 + $0x78] sm:$0xff] %v746
        %1003 = vst [vmem:[%s196 + $0x80] sm:$0xff] %v747
        %1004 = vst [vmem:[%s196 + $0x88] sm:$0xff] %v748
        %1005 = vst [vmem:[%s196 + $0x90] sm:$0xff] %v749
        %1006 = vst [vmem:[%s196 + $0x98] sm:$0xff] %v750
        %1007 = vst [vmem:[%s196 + $0xa0] sm:$0xff] %v751
        %1008 = vst [vmem:[%s196 + $0xa8] sm:$0xff] %v752
        %1009 = vst [vmem:[%s196 + $0xb0] sm:$0xff] %v753
        %1010 = vst [vmem:[%s196 + $0xb8] sm:$0xff] %v754
        %1011 = vst [vmem:[%s196 + $0xc0] sm:$0xff] %v755
        %1012 = vst [vmem:[%s196 + $0xc8] sm:$0xff] %v756
        %1013 = vst [vmem:[%s196 + $0xd0] sm:$0xff] %v757
        %1014 = vst [vmem:[%s196 + $0xd8] sm:$0xff] %v758
        %1015 = vst [vmem:[%s196 + $0xe0] sm:$0xff] %v759
        %1016 = vst [vmem:[%s196 + $0xe8] sm:$0xff] %v760
        %1017 = vst [vmem:[%s196 + $0xf0] sm:$0xff] %v761
        %1018 = vst [vmem:[%s196 + $0xf8] sm:$0xff] %v762
        %1019 = vst [vmem:[%s196 + $0x100] sm:$0xff] %v763
        %1020 = vst [vmem:[%s196 + $0x108] sm:$0xff] %v764
        %1021 = vst [vmem:[%s196 + $0x110] sm:$0xff] %v765
        %1022 = vst [vmem:[%s196 + $0x118] sm:$0xff] %v766
        %1023 = vst [vmem:[%s196 + $0x120] sm:$0xff] %v767
        %1024 = vst [vmem:[%s196 + $0x128] sm:$0xff] %v768
        %1025 = vst [vmem:[%s196 + $0x130] sm:$0xff] %v769
        %1026 = vst [vmem:[%s196 + $0x138] sm:$0xff] %v770
        %1027 = vst [vmem:[%s196 + $0x140] sm:$0xff] %v771
        %1028 = vst [vmem:[%s196 + $0x148] sm:$0xff] %v772
        %1029 = vst [vmem:[%s196 + $0x150] sm:$0xff] %v773
        %1030 = vst [vmem:[%s196 + $0x158] sm:$0xff] %v774
        %1031 = vst [vmem:[%s196 + $0x160] sm:$0xff] %v775
        %1032 = vst [vmem:[%s196 + $0x168] sm:$0xff] %v776
        %1033 = vst [vmem:[%s196 + $0x170] sm:$0xff] %v777
        %1034 = vst [vmem:[%s196 + $0x178] sm:$0xff] %v778
        %1035 = vst [vmem:[%s196 + $0x180] sm:$0xff] %v779
        %1036 = vst [vmem:[%s196 + $0x188] sm:$0xff] %v780
        %1037 = vst [vmem:[%s196 + $0x190] sm:$0xff] %v781
        %1038 = vst [vmem:[%s196 + $0x198] sm:$0xff] %v782
        %1039 = vst [vmem:[%s196 + $0x1a0] sm:$0xff] %v783
        %1040 = vst [vmem:[%s196 + $0x1a8] sm:$0xff] %v784
        %1041 = vst [vmem:[%s196 + $0x1b0] sm:$0xff] %v785
        %1042 = vst [vmem:[%s196 + $0x1b8] sm:$0xff] %v786
        %1043 = vst [vmem:[%s196 + $0x1c0] sm:$0xff] %v787
        %1044 = vst [vmem:[%s196 + $0x1c8] sm:$0xff] %v788
        %1045 = vst [vmem:[%s196 + $0x1d0] sm:$0xff] %v789
        %1046 = vst [vmem:[%s196 + $0x1d8] sm:$0xff] %v790
        %1047 = vst [vmem:[%s196 + $0x1e0] sm:$0xff] %v791
        %1048 = vst [vmem:[%s196 + $0x1e8] sm:$0xff] %v792
        %1049 = vst [vmem:[%s196 + $0x1f0] sm:$0xff] %v793
        %1050 = vst [vmem:[%s196 + $0x1f8] sm:$0xff] %v794
        %1051 = vst [vmem:[%s196 + $0x200] sm:$0xff] %v795
        %1052 = vst [vmem:[%s196 + $0x208] sm:$0xff] %v796
        %1053 = vst [vmem:[%s196 + $0x210] sm:$0xff] %v797
        %1054 = vst [vmem:[%s196 + $0x218] sm:$0xff] %v798
        %1055 = vst [vmem:[%s196 + $0x220] sm:$0xff] %v799
        %1056 = vst [vmem:[%s196 + $0x228] sm:$0xff] %v800
        %1057 = vst [vmem:[%s196 + $0x230] sm:$0xff] %v801
        %1058 = vst [vmem:[%s196 + $0x238] sm:$0xff] %v802
        %1059 = vst [vmem:[%s196 + $0x240] sm:$0xff] %v803
        %1060 = vst [vmem:[%s196 + $0x248] sm:$0xff] %v804
        %1061 = vst [vmem:[%s196 + $0x250] sm:$0xff] %v805
        %1062 = vst [vmem:[%s196 + $0x258] sm:$0xff] %v806
        %1063 = vst [vmem:[%s196 + $0x260] sm:$0xff] %v807
        %1064 = vst [vmem:[%s196 + $0x268] sm:$0xff] %v808
        %1065 = vst [vmem:[%s196 + $0x270] sm:$0xff] %v809
        %1066 = vst [vmem:[%s196 + $0x278] sm:$0xff] %v810
        %1067 = vst [vmem:[%s196 + $0x280] sm:$0xff] %v811
        %1068 = vst [vmem:[%s196 + $0x288] sm:$0xff] %v812
        %1069 = vst [vmem:[%s196 + $0x290] sm:$0xff] %v813
        %1070 = vst [vmem:[%s196 + $0x298] sm:$0xff] %v814
        %1071 = vst [vmem:[%s196 + $0x2a0] sm:$0xff] %v815
        %1072 = vst [vmem:[%s196 + $0x2a8] sm:$0xff] %v816
        %1073 = vst [vmem:[%s196 + $0x2b0] sm:$0xff] %v817
        %1074 = vst [vmem:[%s196 + $0x2b8] sm:$0xff] %v818
        %1075 = vst [vmem:[%s196 + $0x2c0] sm:$0xff] %v819
        %1076 = vst [vmem:[%s196 + $0x2c8] sm:$0xff] %v820
        %1077 = vst [vmem:[%s196 + $0x2d0] sm:$0xff] %v821
        %1078 = vst [vmem:[%s196 + $0x2d8] sm:$0xff] %v822
        %1079 = vst [vmem:[%s196 + $0x2e0] sm:$0xff] %v823
        %1080 = vst [vmem:[%s196 + $0x2e8] sm:$0xff] %v824
        %1081 = vst [vmem:[%s196 + $0x2f0] sm:$0xff] %v825
        %1082 = vst [vmem:[%s196 + $0x2f8] sm:$0xff] %v826
        %1083 = vst [vmem:[%s196 + $0x300] sm:$0xff] %v827
        %1084 = vst [vmem:[%s196 + $0x308] sm:$0xff] %v828
        %1085 = vst [vmem:[%s196 + $0x310] sm:$0xff] %v829
        %1086 = vst [vmem:[%s196 + $0x318] sm:$0xff] %v830
        %1087 = vst [vmem:[%s196 + $0x320] sm:$0xff] %v831
        %1088 = vst [vmem:[%s196 + $0x328] sm:$0xff] %v832
        %1089 = vst [vmem:[%s196 + $0x330] sm:$0xff] %v833
        %1090 = vst [vmem:[%s196 + $0x338] sm:$0xff] %v834
        %1091 = vst [vmem:[%s196 + $0x340] sm:$0xff] %v835
        %1092 = vst [vmem:[%s196 + $0x348] sm:$0xff] %v836
        %1093 = vst [vmem:[%s196 + $0x350] sm:$0xff] %v837
        %1094 = vst [vmem:[%s196 + $0x358] sm:$0xff] %v838
        %1095 = vst [vmem:[%s196 + $0x360] sm:$0xff] %v839
        %1096 = vst [vmem:[%s196 + $0x368] sm:$0xff] %v840
        %1097 = vst [vmem:[%s196 + $0x370] sm:$0xff] %v841
        %1098 = vst [vmem:[%s196 + $0x378] sm:$0xff] %v842
        %1099 = vst [vmem:[%s196 + $0x380] sm:$0xff] %v843
        %1100 = vst [vmem:[%s196 + $0x388] sm:$0xff] %v844
        %1101 = vst [vmem:[%s196 + $0x390] sm:$0xff] %v845
        %1102 = vst [vmem:[%s196 + $0x398] sm:$0xff] %v846
        %1103 = vst [vmem:[%s196 + $0x3a0] sm:$0xff] %v847
        %1104 = vst [vmem:[%s196 + $0x3a8] sm:$0xff] %v848
        %1105 = vst [vmem:[%s196 + $0x3b0] sm:$0xff] %v849
        %1106 = vst [vmem:[%s196 + $0x3b8] sm:$0xff] %v850
        %1107 = vst [vmem:[%s196 + $0x3c0] sm:$0xff] %v851
        %1108 = vst [vmem:[%s196 + $0x3c8] sm:$0xff] %v852
        %1109 = vst [vmem:[%s196 + $0x3d0] sm:$0xff] %v853
        %1110 = vst [vmem:[%s196 + $0x3d8] sm:$0xff] %v854
        %1111 = vst [vmem:[%s196 + $0x3e0] sm:$0xff] %v855
        %1112 = vst [vmem:[%s196 + $0x3e8] sm:$0xff] %v856
        %1113 = vst [vmem:[%s196 + $0x3f0] sm:$0xff] %v857
        %1114 = vst [vmem:[%s196 + $0x3f8] sm:$0xff] %v858
        %1115 = vst [vmem:[%s196 + $0x400] sm:$0xff] %v859
        %1116 = vst [vmem:[%s196 + $0x408] sm:$0xff] %v860
        %1117 = vst [vmem:[%s196 + $0x410] sm:$0xff] %v861
        %1118 = vst [vmem:[%s196 + $0x418] sm:$0xff] %v862
        %1119 = vst [vmem:[%s196 + $0x420] sm:$0xff] %v863
        %1120 = vst [vmem:[%s196 + $0x428] sm:$0xff] %v864
        %1121 = vst [vmem:[%s196 + $0x430] sm:$0xff] %v865
        %1122 = vst [vmem:[%s196 + $0x438] sm:$0xff] %v866
        %1123 = vst [vmem:[%s196 + $0x440] sm:$0xff] %v867
        %1124 = vst [vmem:[%s196 + $0x448] sm:$0xff] %v868
        %1125 = vst [vmem:[%s196 + $0x450] sm:$0xff] %v869
        %1126 = vst [vmem:[%s196 + $0x458] sm:$0xff] %v870
        %1127 = vst [vmem:[%s196 + $0x460] sm:$0xff] %v871
        %1128 = vst [vmem:[%s196 + $0x468] sm:$0xff] %v872
        %1129 = vst [vmem:[%s196 + $0x470] sm:$0xff] %v873
        %1130 = vst [vmem:[%s196 + $0x478] sm:$0xff] %v874
        %1131 = vst [vmem:[%s196 + $0x480] sm:$0xff] %v875
        %1132 = vst [vmem:[%s196 + $0x488] sm:$0xff] %v876
        %1133 = vst [vmem:[%s196 + $0x490] sm:$0xff] %v877
        %1134 = vst [vmem:[%s196 + $0x498] sm:$0xff] %v878
        %1135 = vst [vmem:[%s196 + $0x4a0] sm:$0xff] %v879
        %1136 = vst [vmem:[%s196 + $0x4a8] sm:$0xff] %v880
        %1137 = vst [vmem:[%s196 + $0x4b0] sm:$0xff] %v881
        %1138 = vst [vmem:[%s196 + $0x4b8] sm:$0xff] %v882
        %1139 = vst [vmem:[%s196 + $0x4c0] sm:$0xff] %v883
        %1140 = vst [vmem:[%s196 + $0x4c8] sm:$0xff] %v884
        %1141 = vst [vmem:[%s196 + $0x4d0] sm:$0xff] %v885
        %1142 = vst [vmem:[%s196 + $0x4d8] sm:$0xff] %v886
        %1143 = vst [vmem:[%s196 + $0x4e0] sm:$0xff] %v887
        %1144 = vst [vmem:[%s196 + $0x4e8] sm:$0xff] %v888
        %1145 = vst [vmem:[%s196 + $0x4f0] sm:$0xff] %v889
        %1146 = vst [vmem:[%s196 + $0x4f8] sm:$0xff] %v890
        %1147 = vst [vmem:[%s196 + $0x500] sm:$0xff] %v891
        %1148 = vst [vmem:[%s196 + $0x508] sm:$0xff] %v892
        %1149 = vst [vmem:[%s196 + $0x510] sm:$0xff] %v893
        %1150 = vst [vmem:[%s196 + $0x518] sm:$0xff] %v894
        %1151 = vst [vmem:[%s196 + $0x520] sm:$0xff] %v895
        %1152 = vst [vmem:[%s196 + $0x528] sm:$0xff] %v896
        %1153 = vst [vmem:[%s196 + $0x530] sm:$0xff] %v897
        %1154 = vst [vmem:[%s196 + $0x538] sm:$0xff] %v898
        %1155 = vst [vmem:[%s196 + $0x540] sm:$0xff] %v899
        %1156 = vst [vmem:[%s196 + $0x548] sm:$0xff] %v900
        %1157 = vst [vmem:[%s196 + $0x550] sm:$0xff] %v901
        %1158 = vst [vmem:[%s196 + $0x558] sm:$0xff] %v902
        %1159 = vst [vmem:[%s196 + $0x560] sm:$0xff] %v903
        %1160 = vst [vmem:[%s196 + $0x568] sm:$0xff] %v904
        %1161 = vst [vmem:[%s196 + $0x570] sm:$0xff] %v905
        %1162 = vst [vmem:[%s196 + $0x578] sm:$0xff] %v906
        %1163 = vst [vmem:[%s196 + $0x580] sm:$0xff] %v907
        %1164 = vst [vmem:[%s196 + $0x588] sm:$0xff] %v908
        %1165 = vst [vmem:[%s196 + $0x590] sm:$0xff] %v909
        %1166 = vst [vmem:[%s196 + $0x598] sm:$0xff] %v910
        %1167 = vst [vmem:[%s196 + $0x5a0] sm:$0xff] %v911
        %1168 = vst [vmem:[%s196 + $0x5a8] sm:$0xff] %v912
        %1169 = vst [vmem:[%s196 + $0x5b0] sm:$0xff] %v913
        %1170 = vst [vmem:[%s196 + $0x5b8] sm:$0xff] %v914
        %1171 = vst [vmem:[%s196 + $0x5c0] sm:$0xff] %v915
        %1172 = vst [vmem:[%s196 + $0x5c8] sm:$0xff] %v916
        %1173 = vst [vmem:[%s196 + $0x5d0] sm:$0xff] %v917
        %1174 = vst [vmem:[%s196 + $0x5d8] sm:$0xff] %v918
        %1175 = vst [vmem:[%s196 + $0x5e0] sm:$0xff] %v919
        %1176 = vst [vmem:[%s196 + $0x5e8] sm:$0xff] %v920
        %1177 = vst [vmem:[%s196 + $0x5f0] sm:$0xff] %v921
        %1178 = vst [vmem:[%s196 + $0x5f8] sm:$0xff] %v922
        %1179 = vst [vmem:[%s196 + $0x600] sm:$0xff] %v923
        %1180 = vst [vmem:[%s196 + $0x608] sm:$0xff] %v924
        %1181 = vst [vmem:[%s196 + $0x610] sm:$0xff] %v925
        %1182 = vst [vmem:[%s196 + $0x618] sm:$0xff] %v926
        %1183 = vst [vmem:[%s196 + $0x620] sm:$0xff] %v927
        %1184 = vst [vmem:[%s196 + $0x628] sm:$0xff] %v928
        %1185 = vst [vmem:[%s196 + $0x630] sm:$0xff] %v929
        %1186 = vst [vmem:[%s196 + $0x638] sm:$0xff] %v930
        %1187 = vst [vmem:[%s196 + $0x640] sm:$0xff] %v931
        %1188 = vst [vmem:[%s196 + $0x648] sm:$0xff] %v932
        %1189 = vst [vmem:[%s196 + $0x650] sm:$0xff] %v933
        %1190 = vst [vmem:[%s196 + $0x658] sm:$0xff] %v934
        %1191 = vst [vmem:[%s196 + $0x660] sm:$0xff] %v935
        %1192 = vst [vmem:[%s196 + $0x668] sm:$0xff] %v936
        %1193 = vst [vmem:[%s196 + $0x670] sm:$0xff] %v937
        %1194 = vst [vmem:[%s196 + $0x678] sm:$0xff] %v938
        %1195 = vst [vmem:[%s196 + $0x680] sm:$0xff] %v939
        %1196 = vst [vmem:[%s196 + $0x688] sm:$0xff] %v940
        %1197 = vst [vmem:[%s196 + $0x690] sm:$0xff] %v941
        %1198 = vst [vmem:[%s196 + $0x698] sm:$0xff] %v942
        %1199 = vst [vmem:[%s196 + $0x6a0] sm:$0xff] %v943
        %1200 = vst [vmem:[%s196 + $0x6a8] sm:$0xff] %v944
        %1201 = vst [vmem:[%s196 + $0x6b0] sm:$0xff] %v945
        %1202 = vst [vmem:[%s196 + $0x6b8] sm:$0xff] %v946
        %1203 = vst [vmem:[%s196 + $0x6c0] sm:$0xff] %v947
        %1204 = vst [vmem:[%s196 + $0x6c8] sm:$0xff] %v948
        %1205 = vst [vmem:[%s196 + $0x6d0] sm:$0xff] %v949
        %1206 = vst [vmem:[%s196 + $0x6d8] sm:$0xff] %v950
        %1207 = vst [vmem:[%s196 + $0x6e0] sm:$0xff] %v951
        %1208 = vst [vmem:[%s196 + $0x6e8] sm:$0xff] %v952
        %1209 = vst [vmem:[%s196 + $0x6f0] sm:$0xff] %v953
        %1210 = vst [vmem:[%s196 + $0x6f8] sm:$0xff] %v954
        %1211 = vst [vmem:[%s196 + $0x700] sm:$0xff] %v955
        %1212 = vst [vmem:[%s196 + $0x708] sm:$0xff] %v956
        %1213 = vst [vmem:[%s196 + $0x710] sm:$0xff] %v957
        %1214 = vst [vmem:[%s196 + $0x718] sm:$0xff] %v958
        %1215 = vst [vmem:[%s196 + $0x720] sm:$0xff] %v959
        %1216 = vst [vmem:[%s196 + $0x728] sm:$0xff] %v960
        %1217 = vst [vmem:[%s196 + $0x730] sm:$0xff] %v961
        %1218 = vst [vmem:[%s196 + $0x738] sm:$0xff] %v962
        %1219 = vst [vmem:[%s196 + $0x740] sm:$0xff] %v963
        %1220 = vst [vmem:[%s196 + $0x748] sm:$0xff] %v964
        %1221 = vst [vmem:[%s196 + $0x750] sm:$0xff] %v965
        %1222 = vst [vmem:[%s196 + $0x758] sm:$0xff] %v966
        %1223 = vst [vmem:[%s196 + $0x760] sm:$0xff] %v967
        %1224 = vst [vmem:[%s196 + $0x768] sm:$0xff] %v968
        %1225 = vst [vmem:[%s196 + $0x770] sm:$0xff] %v969
        %1226 = vst [vmem:[%s196 + $0x778] sm:$0xff] %v970
        %1227 = vst [vmem:[%s196 + $0x780] sm:$0xff] %v971
        %1228 = vst [vmem:[%s196 + $0x788] sm:$0xff] %v972
        %1229 = vst [vmem:[%s196 + $0x790] sm:$0xff] %v973
        %1230 = vst [vmem:[%s196 + $0x798] sm:$0xff] %v974
        %1231 = vst [vmem:[%s196 + $0x7a0] sm:$0xff] %v975
        %1232 = vst [vmem:[%s196 + $0x7a8] sm:$0xff] %v976
        %1233 = vst [vmem:[%s196 + $0x7b0] sm:$0xff] %v977
        %1234 = vst [vmem:[%s196 + $0x7b8] sm:$0xff] %v978
        %1235 = vst [vmem:[%s196 + $0x7c0] sm:$0xff] %v979
        %1236 = vst [vmem:[%s196 + $0x7c8] sm:$0xff] %v980
        %1237 = vst [vmem:[%s196 + $0x7d0] sm:$0xff] %v981
        %1238 = vst [vmem:[%s196 + $0x7d8] sm:$0xff] %v982
        %1239 = vst [vmem:[%s196 + $0x7e0] sm:$0xff] %v983
        %1240 = vst [vmem:[%s196 + $0x7e8] sm:$0xff] %v984
        %1241 = vst [vmem:[%s196 + $0x7f0] sm:$0xff] %v985
        %1242 = vst [vmem:[%s196 + $0x7f8] sm:$0xff] %v986
        %s1243 = sand.u32 %s95, 1
        %s1244 = scalar_lea.sflag [#allocation4], %s1243
        %s1245 = sand.u32 %s95, 1
        %s1246 = smul.addr %s1245, 2048
        %s1247 = scalar_lea.vmem [#allocation5], %s1246
        // Predicated region
        $region33: #{tpu_custom_call.1} parent=27 // pred_check
          %p1248 = pneg %p105
        $region34: #{tpu_custom_call.1} parent=27 // pred_check_branch
          %1250 = sbr.rel (%p1248) target = $region36
        $region35: #{tpu_custom_call.1} parent=27 // pred_region
          %s1251 = smul.u32 2, %s23
          %s1252 = smul.u32 128, %s24
          %s1254 = ssub.s32 32768, 32768
          %1255 = vsyncadd %s1244, %s1254
          %s1256 = smul.addr %s1251, 128
          %s1257 = sadd.s32 %s1252, %s1256
          %s1258 = smul.addr %s1257, 128
          %s1259 = scalar_lea.hbm %s2, %s1258
          %s1260 = sshll.u32 %s1247, 4
          %s1261 = int_to_ptr.vmem [resolvable:$true] %s1260
          %1266 = dma.vmem_to_hbm [thread:$0]  %s1261, 32768, %s1259, %s1244, 16384, 16384, 1024
        $region36: #{tpu_custom_call.1} parent=27 // pred_fallthru
          _
      $region28: #{tpu_custom_call.1} parent=5 // pred_fallthru
        _
      %p1267 = scmp.le.s32.totalorder 2, %s14
      // Predicated region
      $region37: #{tpu_custom_call.1} parent=5 // pred_check
        %p1268 = pneg %p1267
      $region38: #{tpu_custom_call.1} parent=5 // pred_check_branch
        %1270 = sbr.rel (%p1268) target = $region40
      $region39: #{tpu_custom_call.1} parent=5 // pred_region
        %s1271 = ssub.s32 %s14, 2
        // Predicated region
        $region41: #{tpu_custom_call.1} parent=39 // pred_check
          %p1272 = pneg %p111
        $region42: #{tpu_custom_call.1} parent=39 // pred_check_branch
          %1274 = sbr.rel (%p1272) target = $region44
        $region43: #{tpu_custom_call.1} parent=39 // pred_region
          %s1275 = sand.u32 %s96, 1
          %s1276 = scalar_lea.sflag [#allocation4], %s1275
          %s1277 = sand.u32 %s96, 1
          %s1278 = smul.addr %s1277, 2048
          %s1279 = scalar_lea.vmem [#allocation5], %s1278
          %1280 = dma.done %s1276, 32768
        $region44: #{tpu_custom_call.1} parent=39 // pred_fallthru
          _
      $region40: #{tpu_custom_call.1} parent=5 // pred_fallthru
        _
    $region6: #{tpu_custom_call.1} parent=1 // loop_footer
      %s18 = sadd.s32 1, %s14
    $region7: #{tpu_custom_call.1} parent=1 // loop_footer_branch
      %13 = sbr.rel target = $region3
    $region8: #{tpu_custom_call.1} parent=1 // loop_exit
      _
    %1281 = vsyncpa [#allocation3], 1
    %s1282 = scalar_lea.sflag [#allocation3], 1
    %1283 = vsyncpa %s1282, 1
    %1284 = vsyncpa [#allocation4], 1
    %s1285 = scalar_lea.sflag [#allocation4], 1
    %1286 = vsyncpa %s1285, 1

</llo_original>
